<compile_context>
chip_gen: v5e
topology: v5e:2x2
jax: 0.10.0
libtpu: 0.0.40
codegen_flags: <defaults>
</compile_context>

<pallas_src>
import numpy as np
import jax
import jax.numpy as jnp
from jax.experimental import pallas as pl
from jax.experimental.pallas import tpu as pltpu

BN_EPS = 1e-5
KSZ = 3  # conv kernel size (static)

_VMEM_SPEC = pl.BlockSpec(memory_space=pltpu.MemorySpace.VMEM)

# --------------------------------------------------------------------------------------
# one-time probe: pltpu.roll rotation direction (jnp.roll convention: out[i] = x[i-shift])
# --------------------------------------------------------------------------------------
_ROLL_IS_JNP = None


def _roll_is_jnp_convention():
    global _ROLL_IS_JNP
    if _ROLL_IS_JNP is None:
        def k(x_ref, o_ref):
            o_ref[...] = pltpu.roll(x_ref[...], shift=1, axis=1)

        x = jnp.arange(8 * 128, dtype=jnp.float32).reshape(8, 128)
        y = pl.pallas_call(
            k,
            out_shape=jax.ShapeDtypeStruct((8, 128), jnp.float32),
            in_specs=[_VMEM_SPEC],
            out_specs=_VMEM_SPEC,
        )(x)
        # jnp.roll convention => out[0, 0] == x[0, 127] == 127
        _ROLL_IS_JNP = bool(float(np.asarray(y)[0, 0]) == 127.0)
    return _ROLL_IS_JNP


def _shift_left(x_flat, s, roll_is_jnp):
    """out[:, n] = x_flat[:, (n + s) % N]; wrapped columns are don't-care (masked later)."""
    if s == 0:
        return x_flat
    n = x_flat.shape[-1]
    shift = (n - s) if roll_is_jnp else s
    return pltpu.roll(x_flat, shift=shift, axis=1)


# --------------------------------------------------------------------------------------
# kernel body
# --------------------------------------------------------------------------------------
def _conv_bn_residual_flat(x_flat, w_t, gamma, beta, lw, lb,
                           pool_in, bcast, mrow, inv_cnt, grid_w, roll_is_jnp):
    """One ResidualConvLayer on the flat (never-reshaped) 16x16 grid.

    x_flat : (Cin, N) activations, column n = b*H*W + h*W + w
    w_t    : (Cout, 9*Cin) conv weight, column = (kh*3 + kw)*Cin + ic
    gamma, beta, lb : (Cout, 1);  lw : (Cout, Cin)
    pool_in: (N, B)  per-image masked-mean pooling matrix for the layer *input*
    bcast  : (B, N)  per-image 0/1 column indicator (broadcasts the residual linear)
    mrow   : (1, N)  0/1 valid-output-column mask for this layer's BN statistics
    inv_cnt: python float, 1 / (B * num_valid_output_columns)
    Returns (Cout, N); only valid columns are meaningful.
    """
    # residual path: masked per-image spatial mean of the input -> linear -> broadcast
    resid = jnp.dot(x_flat, pool_in, preferred_element_type=jnp.float32)       # (Cin, B)
    lin = jnp.dot(lw, resid, preferred_element_type=jnp.float32) + lb          # (Cout, B)
    lin_b = jnp.dot(lin, bcast, preferred_element_type=jnp.float32)            # (Cout, N)

    # im2col via lane rolls on the flat grid (XLU slot, N stays 128-aligned), one GEMM.
    taps = [_shift_left(x_flat, kh * grid_w + kw, roll_is_jnp)
            for kh in range(KSZ) for kw in range(KSZ)]
    patches = jnp.concatenate(taps, axis=0)                                    # (9*Cin, N)
    conv = jnp.dot(w_t, patches, preferred_element_type=jnp.float32)           # (Cout, N)
    # conv bias intentionally NOT added: training-mode BN mean-subtraction cancels it.

    # one-pass masked BN statistics (training-mode biased stats over valid columns),
    # fused per-channel scale + shift, ReLU, then residual broadcast.
    s1 = jnp.sum(conv * mrow, axis=1, keepdims=True)                           # (Cout, 1)
    s2 = jnp.sum(conv * conv * mrow, axis=1, keepdims=True)                    # (Cout, 1)
    mean = s1 * inv_cnt
    var = s2 * inv_cnt - mean * mean
    scale = gamma * jax.lax.rsqrt(var + BN_EPS)
    act = jnp.maximum((conv - mean) * scale + beta, 0.0)                       # (Cout, N)
    return act + lin_b


def _build_kernel(grid_w, inv_cnt1, inv_cnt2, roll_is_jnp):
    def kernel(x_ref,
               w1_ref, g1_ref, be1_ref, l1w_ref, l1b_ref,
               w2_ref, g2_ref, be2_ref, l2w_ref, l2b_ref,
               wu_ref, bu_ref, wd_ref, bd_ref, wq_ref, bq_ref,
               pool0_ref, pool1_ref, pool2_ref, bcast_ref, m1_ref, m2_ref,
               out_ref):
        h1 = _conv_bn_residual_flat(x_ref[...], w1_ref[...], g1_ref[...], be1_ref[...],
                                    l1w_ref[...], l1b_ref[...],
                                    pool0_ref[...], bcast_ref[...], m1_ref[...],
                                    inv_cnt1, grid_w, roll_is_jnp)             # (C1, N)
        h2 = _conv_bn_residual_flat(h1, w2_ref[...], g2_ref[...], be2_ref[...],
                                    l2w_ref[...], l2b_ref[...],
                                    pool1_ref[...], bcast_ref[...], m2_ref[...],
                                    inv_cnt2, grid_w, roll_is_jnp)             # (C2, N)

        # head: reduce first (masked 12x12 per-image mean), keep channels-major so no
        # in-kernel transpose is needed; wrapper flips the tiny (A, B) output.
        feat = jnp.dot(h2, pool2_ref[...], preferred_element_type=jnp.float32)  # (C2, B)
        up = jnp.maximum(
            jnp.dot(wu_ref[...], feat, preferred_element_type=jnp.float32) + bu_ref[...],
            0.0)                                                                # (4*C2, B)
        ff = (jnp.dot(wd_ref[...], up, preferred_element_type=jnp.float32)
              + bd_ref[...] + feat)                                             # (C2, B)
        out_ref[...] = (jnp.dot(wq_ref[...], ff, preferred_element_type=jnp.float32)
                        + bq_ref[...])                                          # (A, B)
        # TODO(synk): model_kl=True branch (fc_kl head) not wired; default model_kl=False.
    return kernel


# --------------------------------------------------------------------------------------
# wrapper
# --------------------------------------------------------------------------------------
def qnetwork_forward(x_nchw, params):
    """x_nchw: (B, C, H, W) float32.  Returns {'q_reward': (B, action_size)}."""
    x = x_nchw.astype(jnp.float32)
    B, C, H, W = x.shape
    HW = H * W
    N = B * HW
    OH1, OW1 = H - KSZ + 1, W - KSZ + 1          # layer-1 valid output extent (14, 14)
    OH2, OW2 = OH1 - KSZ + 1, OW1 - KSZ + 1      # layer-2 valid output extent (12, 12)
    C1 = params["w1"].shape[0]
    action_size = params["wq"].shape[1]
    cin_pad = -(-C // 8) * 8                     # pad layer-1 Cin to a full sublane tile

    # ---- wrapper-side layout plumbing: kernel consumes lane-dense flat layouts ----
    x_cm = jnp.transpose(x, (1, 0, 2, 3)).reshape(C, N)            # (C, B*H*W)
    x_cm = jnp.pad(x_cm, ((0, cin_pad - C), (0, 0)))               # (cin_pad, N)
    w1 = jnp.pad(params["w1"].reshape(C1, KSZ * KSZ, C),
                 ((0, 0), (0, 0), (0, cin_pad - C))).reshape(C1, KSZ * KSZ * cin_pad)
    l1w = jnp.pad(params["l1w"], ((0, 0), (0, cin_pad - C)))
    wu_t = params["wu"].T                                          # (4*C2, C2)
    bu_t = params["bu"].T                                          # (4*C2, 1)
    wd_t = params["wd"].T                                          # (C2, 4*C2)
    bd_t = params["bd"].T                                          # (C2, 1)
    wq_t = params["wq"].T                                          # (A, C2)
    bq_t = params["bq"].T                                          # (A, 1)

    # ---- flat-grid masks, per-image pooling matrices, column indicator (host-side) ----
    hh, ww = np.arange(H)[:, None], np.arange(W)[None, :]
    valid1 = ((hh < OH1) & (ww < OW1)).astype(np.float32).reshape(HW)   # 14x14 region
    valid2 = ((hh < OH2) & (ww < OW2)).astype(np.float32).reshape(HW)   # 12x12 region
    ind = np.kron(np.eye(B, dtype=np.float32), np.ones((1, HW), np.float32))   # (B, N)
    pool0 = (ind / HW).T                                            # (N, B) full-grid mean
    pool1 = (ind * np.tile(valid1, B)).T / valid1.sum()             # (N, B) 14x14 mean
    pool2 = (ind * np.tile(valid2, B)).T / valid2.sum()             # (N, B) 12x12 mean
    m1 = np.tile(valid1, B).reshape(1, N)
    m2 = np.tile(valid2, B).reshape(1, N)
    inv_cnt1 = 1.0 / float(B * valid1.sum())                        # 1/392
    inv_cnt2 = 1.0 / float(B * valid2.sum())                        # 1/288

    kernel = _build_kernel(W, inv_cnt1, inv_cnt2, _roll_is_jnp_convention())

    args = [x_cm,
            w1, params["g1"], params["be1"], l1w, params["l1b"],
            params["w2"], params["g2"], params["be2"], params["l2w"], params["l2b"],
            wu_t, bu_t, wd_t, bd_t, wq_t, bq_t,
            jnp.asarray(pool0, dtype=jnp.float32),
            jnp.asarray(pool1, dtype=jnp.float32),
            jnp.asarray(pool2, dtype=jnp.float32),
            jnp.asarray(ind, dtype=jnp.float32),
            jnp.asarray(m1, dtype=jnp.float32),
            jnp.asarray(m2, dtype=jnp.float32)]

    q_cm = pl.pallas_call(
        kernel,
        out_shape=jax.ShapeDtypeStruct((action_size, B), jnp.float32),
        in_specs=[_VMEM_SPEC] * len(args),
        out_specs=_VMEM_SPEC,
        # Tiny problem (<1 MiB live): comfortably inside scoped VMEM on v5e/v6e/v7x.
        # TODO(synk): if batch scales up, add a 'parallel' grid over N with two-phase BN
        # (v7x: 2 TensorCores, 64 MiB VMEM) instead of raising this limit.
        compiler_params=pltpu.CompilerParams(vmem_limit_bytes=32 * 1024 * 1024),
    )(*args)
    return {"q_reward": q_cm.T}                                     # (B, action_size)


# --------------------------------------------------------------------------------------
# independent pure-JAX reference (lax conv, PyTorch-style math) for checking
# --------------------------------------------------------------------------------------
def qnetwork_reference(x_nchw, params):
    p = params
    x = x_nchw.astype(jnp.float32)

    def block(x, w_t, b, gamma, beta, lw, lb):
        cin, cout = x.shape[1], w_t.shape[0]
        w_hwio = w_t.T.reshape(KSZ, KSZ, cin, cout)   # row idx = (kh*3+kw)*Cin+ic
        conv = jax.lax.conv_general_dilated(
            x, w_hwio, window_strides=(1, 1), padding="VALID",
            dimension_numbers=("NCHW", "HWIO", "NCHW"))
        conv = conv + b[None, :, None, None]
        mean = jnp.mean(conv, axis=(0, 2, 3), keepdims=True)
        var = jnp.mean((conv - mean) ** 2, axis=(0, 2, 3), keepdims=True)
        g = gamma[:, 0][None, :, None, None]
        be = beta[:, 0][None, :, None, None]
        bn = g * (conv - mean) * jax.lax.rsqrt(var + BN_EPS) + be
        act = jnp.maximum(bn, 0.0)
        resid = jnp.mean(x, axis=(2, 3))              # (B, Cin)
        lin = resid @ lw.T + lb[:, 0]                 # (B, Cout)
        return act + lin[:, :, None, None]

    h1 = block(x, p["w1"], p["b1"], p["g1"], p["be1"], p["l1w"], p["l1b"])
    h2 = block(h1, p["w2"], p["b2"], p["g2"], p["be2"], p["l2w"], p["l2b"])
    feat = jnp.mean(h2, axis=(2, 3))
    up = jnp.maximum(feat @ p["wu"] + p["bu"], 0.0)
    ff = up @ p["wd"] + p["bd"] + feat
    return ff @ p["wq"] + p["bq"]


# --------------------------------------------------------------------------------------
# parameter init (PyTorch-default-style), laid out in the orientation the kernel consumes
# --------------------------------------------------------------------------------------
def init_params(key, input_channels, action_size, widths=(16, 32)):
    c0, c1, c2 = input_channels, widths[0], widths[1]
    ffdim = 4 * c2
    keys = iter(jax.random.split(key, 8))

    def uniform(k, shape, bound):
        return jax.random.uniform(k, shape, jnp.float32, -bound, bound)

    def conv_init(k, cin, cout):
        kw_, kb_ = jax.random.split(k)
        bound = 1.0 / np.sqrt(cin * KSZ * KSZ)
        # (Cout, 9*Cin): column index = (kh*3 + kw)*Cin + ic (matches im2col order)
        return uniform(kw_, (cout, KSZ * KSZ * cin), bound), uniform(kb_, (cout,), bound)

    def lin_cm_init(k, cin, cout):
        # channel-major residual linear: weight (Cout, Cin), bias (Cout, 1)
        kw_, kb_ = jax.random.split(k)
        bound = 1.0 / np.sqrt(cin)
        return uniform(kw_, (cout, cin), bound), uniform(kb_, (cout, 1), bound)

    def lin_bm_init(k, cin, cout):
        # batch-major head linear: weight (in, out), bias (1, out)
        kw_, kb_ = jax.random.split(k)
        bound = 1.0 / np.sqrt(cin)
        return uniform(kw_, (cin, cout), bound), uniform(kb_, (1, cout), bound)

    p = {}
    p["w1"], p["b1"] = conv_init(next(keys), c0, c1)
    p["g1"] = jnp.ones((c1, 1), jnp.float32)       # BatchNorm2d weight init
    p["be1"] = jnp.zeros((c1, 1), jnp.float32)     # BatchNorm2d bias init
    p["l1w"], p["l1b"] = lin_cm_init(next(keys), c0, c1)
    p["w2"], p["b2"] = conv_init(next(keys), c1, c2)
    p["g2"] = jnp.ones((c2, 1), jnp.float32)
    p["be2"] = jnp.zeros((c2, 1), jnp.float32)
    p["l2w"], p["l2b"] = lin_cm_init(next(keys), c1, c2)
    p["wu"], p["bu"] = lin_bm_init(next(keys), c2, ffdim)
    p["wd"], p["bd"] = lin_bm_init(next(keys), ffdim, c2)
    p["wq"], p["bq"] = lin_bm_init(next(keys), c2, action_size)
    return p


if __name__ == "__main__":
    B, C, H, W = 2, 4, 16, 16
    ACTION_SIZE = 5
    WIDTHS = (16, 32)

    key = jax.random.PRNGKey(0)
    pkey, xkey = jax.random.split(key)
    params = init_params(pkey, C, ACTION_SIZE, WIDTHS)
    x = jax.random.normal(xkey, (B, C, H, W), jnp.float32)

    out = qnetwork_forward(x, params)
    q = jax.block_until_ready(out["q_reward"])
    assert q.shape == (B, ACTION_SIZE), q.shape

    ref = np.asarray(qnetwork_reference(x, params))
    if not np.allclose(np.asarray(q), ref, rtol=1e-3, atol=1e-3):
        raise AssertionError("Pallas kernel output does not match JAX reference")

    print("KERNEL_OK")
</pallas_src>

<mosaic_0001>
module attributes {stable_mosaic.version = 11 : i64} {
  func.func @k(%arg0: memref<8x128xf32, #tpu.memory_space<vmem>>, %arg1: memref<8x128xf32, #tpu.memory_space<vmem>>) attributes {dimension_semantics = [], scalar_prefetch = 0 : i64, scratch_operands = 0 : i64, tpu.core_type = #tpu.core_type<tc>} {
    %c0 = arith.constant 0 : index
    %c0_0 = arith.constant 0 : index
    %0 = vector.load %arg0[%c0, %c0_0] : memref<8x128xf32, #tpu.memory_space<vmem>>, vector<8x128xf32>
    %c1_i32 = arith.constant 1 : i32
    %1 = tpu.dynamic_rotate %0 by %c1_i32 dim 1 : vector<8x128xf32>, i32 -> vector<8x128xf32>
    %c0_1 = arith.constant 0 : index
    %c0_2 = arith.constant 0 : index
    %2 = vector.load %arg1[%c0_1, %c0_2] : memref<8x128xf32, #tpu.memory_space<vmem>>, vector<8x128xf32>
    tpu.vector_store %arg1[%c0_1, %c0_2], %1 {strides = array<i32>} : memref<8x128xf32, #tpu.memory_space<vmem>>, vector<8x128xf32>,
    return
  }
}

</mosaic_0001>

<llo_original>
// kernel: tpu_custom_call.1
$region0: #{tpu_custom_call.1}
  #allocation0 [shape = 'u32[]', space=smem, size = 0x4, offset = 0x4, fixed_abs, tag = 'smem constant byte address 0x4 - core index']
  #allocation1 [shape = 'u32[72,128]{1,0:T(1,128)}', space=vmem, size = 0x9000, scoped, tag = 'internal scratch']
  %s0 = inlined_call_operand.hbm [shape: f32[8,128], index: 0, kind: input, shape index: {}]
  %s1 = inlined_call_operand.hbm [shape: f32[8,128], index: 1, kind: output, shape index: {}]
  %s2 = sld [smem:[#allocation0]]
  $region18: #{tpu_custom_call.1} parent=0
    _
  %s4 = ssub.s32 1, %s2
  %s5 = scalar_select 0, %s4, %s2
  $region1: #{tpu_custom_call.1} parent=0
    #allocation2 [shape = 'u8[4096]{0}', space=vmem, size = 0x1000, scoped, tag = 'input window, operand 0, single buffered']
    #allocation3 [shape = 's32[1]{0}', space=sflag, size = 0x4, scoped, tag = 'scoped memory for tpu_custom_call.1']
    #allocation4 [shape = 's32[1]{0}', space=sflag, size = 0x4, scoped, tag = 'scoped memory for tpu_custom_call.1']
    #allocation5 [shape = 'u8[4096]{0}', space=vmem, size = 0x1000, scoped, tag = 'output window, operand 0, single buffered']
    %6 = vsyncpa [#allocation3], 0
    %7 = vsyncpa [#allocation4], 0
    // Predicated region
    $region2: #{tpu_custom_call.1} parent=1 // pred_check
      _
    $region3: #{tpu_custom_call.1} parent=1 // pred_check_branch
      %9 = sbr.rel (0) target = $region5
    $region4: #{tpu_custom_call.1} parent=1 // pred_region
      %11 = vsyncadd [#allocation3], 0
      %s13 = sshll.u32 %s0, 4
      %s14 = int_to_ptr.hbm [resolvable:$true] %s13
      %s15 = sshll.u32 [#allocation2], 4
      %s16 = int_to_ptr.vmem [resolvable:$true] %s15
      %18 = dma.hbm_to_vmem [thread:$0]  %s14, 128, %s16, [#allocation3]
    $region5: #{tpu_custom_call.1} parent=1 // pred_fallthru
      _
    // Predicated region
    $region6: #{tpu_custom_call.1} parent=1 // pred_check
      _
    $region7: #{tpu_custom_call.1} parent=1 // pred_check_branch
      %20 = sbr.rel (0) target = $region9
    $region8: #{tpu_custom_call.1} parent=1 // pred_region
      %22 = dma.done [#allocation3], 128
    $region9: #{tpu_custom_call.1} parent=1 // pred_fallthru
      _
    %v23 = vld [vmem:[#allocation2] sm:$0xff]
    %24 = vrot.lane.b32.xlu0 %v23, 1
    %v25 = vpop.permute.xlu0 %24
    %26 = vst [vmem:[#allocation5] sm:$0xff] %v25
    // Predicated region
    $region10: #{tpu_custom_call.1} parent=1 // pred_check
      _
    $region11: #{tpu_custom_call.1} parent=1 // pred_check_branch
      %28 = sbr.rel (0) target = $region13
    $region12: #{tpu_custom_call.1} parent=1 // pred_region
      %30 = vsyncadd [#allocation4], 0
      %s32 = sshll.u32 [#allocation5], 4
      %s33 = int_to_ptr.vmem [resolvable:$true] %s32
      %s34 = sshll.u32 %s1, 4
      %s35 = int_to_ptr.hbm [resolvable:$true] %s34
      %37 = dma.vmem_to_hbm [thread:$0]  %s33, 128, %s35, [#allocation4]
    $region13: #{tpu_custom_call.1} parent=1 // pred_fallthru
      _
    // Predicated region
    $region14: #{tpu_custom_call.1} parent=1 // pred_check
      _
    $region15: #{tpu_custom_call.1} parent=1 // pred_check_branch
      %39 = sbr.rel (0) target = $region17
    $region16: #{tpu_custom_call.1} parent=1 // pred_region
      %41 = dma.done [#allocation4], 128
    $region17: #{tpu_custom_call.1} parent=1 // pred_fallthru
      _
    %42 = vsyncpa [#allocation3], 1
    %43 = vsyncpa [#allocation4], 1

</llo_original>
